<compile_context>
chip_gen: v7x
topology: tpu7x:2x2x1
jax: 0.10.0
libtpu: 0.0.40
codegen_flags: <defaults>
</compile_context>

<pallas_src>
import functools

import jax
import jax.numpy as jnp
from jax import lax
from jax.experimental import pallas as pl
from jax.experimental.pallas import tpu as pltpu


# --------------------------------------------------------------------------- #
# Kernel
# --------------------------------------------------------------------------- #
def _dhn_loss_kernel(u_ref, y_ref, Ut_ref, Yt_ref, out_ref, acc_ref,
                     *, alpha, num_train, batch, tn, steps):
    c = pl.program_id(0)            # core / split index ("parallel")
    j = pl.program_id(1)            # reduction step within this split
    nsteps = pl.num_programs(1)

    @pl.when(j == 0)
    def _():
        acc_ref[...] = jnp.zeros_like(acc_ref)

    u_f32 = u_ref[...]                                   # (batch, bit)     f32, resident
    u_s = u_f32.astype(Ut_ref.dtype)                     # tiny cast, stream dtype
    y_s = y_ref[...]                                     # (batch, n_class) stream dtype
    U_t = Ut_ref[...]                                    # (bit, tn)        streamed
    Y_t = Yt_ref[...]                                    # (n_class, tn)    streamed

    # inner_product = u @ U.T * 0.5  -> with transposed memory this is u @ U_t
    ip = jnp.dot(u_s, U_t, preferred_element_type=jnp.float32) * 0.5     # (batch, tn)
    # s = (y @ Y.T > 0)  (labels are 0/1 -> exact in bf16)
    sim = jnp.dot(y_s, Y_t, preferred_element_type=jnp.float32)
    s = (sim > 0.0).astype(jnp.float32)

    # log(1 + exp(-|ip|)) + clamp(ip, min=0) - s * ip   (stable softplus form)
    ll = jnp.log1p(jnp.exp(-jnp.abs(ip))) + jnp.maximum(ip, 0.0) - s * ip

    base = (c * steps + j) * tn
    has_pad = base + tn > num_train

    # Interior tiles: pure VPU accumulate, no masking work.
    @pl.when(jnp.logical_not(has_pad))
    def _():
        acc_ref[...] += ll

    # Only the tail tile(s) pay for the mask (padding gives ll=log(2) != 0).
    @pl.when(has_pad)
    def _():
        col = lax.broadcasted_iota(jnp.int32, (batch, tn), dimension=1)
        valid = col < (num_train - base)
        acc_ref[...] += jnp.where(valid, ll, 0.0)

    @pl.when(j == nsteps - 1)
    def _():
        # Single cross-lane reduction per core, once, at the end.
        partial = jnp.sum(acc_ref[...]) / jnp.float32(batch * num_train)
        # Quantization loss from the exact f32 u; added once (core 0 only).
        quant = alpha * jnp.mean(jnp.abs(jnp.abs(u_f32) - 1.0))
        value = partial + jnp.where(c == 0, quant, 0.0)
        out_ref[...] = jnp.full(out_ref.shape, value, dtype=out_ref.dtype)


# --------------------------------------------------------------------------- #
# Wrapper
# --------------------------------------------------------------------------- #
def _detect_tpu_defaults():
    """Per-generation (vmem_limit_bytes, n_split) defaults."""
    kind = ""
    try:
        kind = str(getattr(jax.devices()[0], "device_kind", "")).lower()
    except Exception:
        pass
    vmem_phys = None
    try:
        info = pltpu.get_tpu_info()
        vmem_phys = int(getattr(info, "vmem_capacity_bytes", 0)) or None
    except Exception:
        vmem_phys = None
    is_v7 = ("v7" in kind) or ("7x" in kind)
    if vmem_phys is None:
        vmem_phys = 64 * 1024 * 1024 if is_v7 else 128 * 1024 * 1024
    # Scoped limit: ~75% of physical, capped at 112 MiB (48 MiB on v7x).
    vmem_limit = min(int(vmem_phys * 3) // 4, 112 * 1024 * 1024)
    n_split = 2 if is_v7 else 1
    return vmem_limit, n_split


def dhn_loss(u, y, ind, U, Y, *, alpha, tn=None, n_split=None,
             stream_dtype=jnp.bfloat16, vmem_limit_bytes=None):
    """Returns (loss_scalar, updated_U, updated_Y) — mirrors DHNLoss.forward,
    which mutates self.U / self.Y before computing the loss.

    stream_dtype=jnp.float32 recovers exact f32 streaming semantics; the
    default bf16 halves HBM traffic for the (large) U/Y buffers."""
    u = u.astype(jnp.float32)
    y_f = y.astype(jnp.float32)

    # Module side effect: scatter current batch into the code/label memory.
    U_new = U.at[ind].set(u)
    Y_new = Y.at[ind].set(y_f)

    batch, bit = u.shape
    num_train, n_class = Y_new.shape

    auto_vmem, auto_split = _detect_tpu_defaults()
    if vmem_limit_bytes is None:
        vmem_limit_bytes = auto_vmem
    if n_split is None:
        n_split = auto_split

    # ---- tile-size selection: lane-dense transposed tiles, VMEM-budgeted --- #
    def _ceil_div(a, b):
        return -(-a // b)

    def _round_up(a, m):
        return _ceil_div(a, m) * m

    itemsize = jnp.dtype(stream_dtype).itemsize
    sub = 32 // itemsize                       # sublane packing (8 f32 / 16 bf16)
    bpad = _round_up(bit, sub)
    cpad = _round_up(n_class, sub)
    brow = _round_up(batch, 8)

    # Bytes per lane-column of tn: double-buffered streamed U & Y tiles + f32 acc.
    per_col = 2 * (bpad + cpad) * itemsize + 4 * brow
    budget = max(1 * 1024 * 1024, int(vmem_limit_bytes) - 2 * 1024 * 1024)
    cap = max(128, (budget // per_col) // 128 * 128)
    cap = min(cap, 128 * 1024)                 # diminishing returns beyond ~128K

    per_split = _ceil_div(num_train, max(1, int(n_split)))
    tn_max = _round_up(per_split, 128)
    tn = cap if tn is None else min(max(128, (int(tn) // 128) * 128), cap)
    tn = min(tn, tn_max)

    n_split = max(1, int(n_split))
    steps = _ceil_div(per_split, tn)
    padded = n_split * steps * tn

    # Stream the big buffers transposed (feature-major) in a narrow dtype; pad
    # the num_train axis (padded columns are masked in-kernel).
    U_s = U_new.astype(stream_dtype).T          # (bit, num_train)
    Y_s = Y_new.astype(stream_dtype).T          # (n_class, num_train)
    if padded != num_train:
        pad = padded - num_train
        U_s = jnp.pad(U_s, ((0, 0), (0, pad)))
        Y_s = jnp.pad(Y_s, ((0, 0), (0, pad)))
    y_s = y_f.astype(stream_dtype)              # tiny, resident

    kernel = functools.partial(
        _dhn_loss_kernel, alpha=float(alpha),
        num_train=num_train, batch=batch, tn=tn, steps=steps)

    out = pl.pallas_call(
        kernel,
        out_shape=jax.ShapeDtypeStruct((n_split, 8, 128), jnp.float32),
        grid_spec=pltpu.PrefetchScalarGridSpec(
            num_scalar_prefetch=0,
            grid=(n_split, steps),
            in_specs=[
                pl.BlockSpec((batch, bit), lambda c, j: (0, 0)),          # u (resident f32)
                pl.BlockSpec((batch, n_class), lambda c, j: (0, 0)),      # y (resident)
                pl.BlockSpec((bit, tn), lambda c, j: (0, c * steps + j)),      # U tile
                pl.BlockSpec((n_class, tn), lambda c, j: (0, c * steps + j)),  # Y tile
            ],
            out_specs=pl.BlockSpec((1, 8, 128), lambda c, j: (c, 0, 0)),
            scratch_shapes=[pltpu.VMEM((batch, tn), jnp.float32)],
        ),
        compiler_params=pltpu.CompilerParams(
            dimension_semantics=("parallel", "arbitrary"),
            vmem_limit_bytes=int(vmem_limit_bytes)),
    )(u, y_s, U_s, Y_s)

    loss = jnp.sum(out[:, 0, 0])
    return loss, U_new, Y_new


# --------------------------------------------------------------------------- #
# Pure-JAX reference (mirrors the PyTorch module; optionally precision-matched)
# --------------------------------------------------------------------------- #
def _reference(u, y, ind, U, Y, alpha, stream_dtype=jnp.float32):
    u = u.astype(jnp.float32)
    y_f = y.astype(jnp.float32)
    U_new = U.at[ind].set(u)
    Y_new = Y.at[ind].set(y_f)
    u_m = u.astype(stream_dtype).astype(jnp.float32)
    y_m = y_f.astype(stream_dtype).astype(jnp.float32)
    U_m = U_new.astype(stream_dtype).astype(jnp.float32)
    Y_m = Y_new.astype(stream_dtype).astype(jnp.float32)
    s = (jnp.matmul(y_m, Y_m.T, precision=lax.Precision.HIGHEST) > 0).astype(jnp.float32)
    ip = jnp.matmul(u_m, U_m.T, precision=lax.Precision.HIGHEST) * 0.5
    ll = jnp.log(1.0 + jnp.exp(-jnp.abs(ip))) + jnp.maximum(ip, 0.0) - s * ip
    return jnp.mean(ll) + alpha * jnp.mean(jnp.abs(jnp.abs(u) - 1.0))


if __name__ == "__main__":
    # Small config: num_train=600 (exercises tail masking / padding),
    # n_class=16, bit=32, alpha=0.1, batch=8.
    num_train, n_class, bit, batch = 600, 16, 32, 8
    alpha = 0.1

    key = jax.random.PRNGKey(0)
    ku, ky, ki, kU, kY = jax.random.split(key, 5)

    u = jax.random.normal(ku, (batch, bit), dtype=jnp.float32)
    labels = jax.random.randint(ky, (batch,), 0, n_class)
    y = jax.nn.one_hot(labels, n_class, dtype=jnp.float32)
    ind = jax.random.choice(ki, num_train, (batch,), replace=False)

    # Module state buffers (zeros in __init__); pre-populate a few rows so the
    # similarity matrix is non-trivial.
    U = jnp.zeros((num_train, bit), dtype=jnp.float32)
    Y = jnp.zeros((num_train, n_class), dtype=jnp.float32)
    U = U.at[:32].set(jnp.tanh(jax.random.normal(kU, (32, bit), dtype=jnp.float32)))
    Y = Y.at[:32].set(jax.nn.one_hot(
        jax.random.randint(kY, (32,), 0, n_class), n_class, dtype=jnp.float32))

    ref_bf16 = _reference(u, y, ind, U, Y, alpha, stream_dtype=jnp.bfloat16)
    ref_f32 = _reference(u, y, ind, U, Y, alpha, stream_dtype=jnp.float32)

    # 1) Auto configuration (large tile, generation-dependent split / VMEM).
    loss, U_new, Y_new = dhn_loss(u, y, ind, U, Y, alpha=alpha)
    loss = jax.block_until_ready(loss)
    assert jnp.allclose(loss, ref_bf16, rtol=2e-3, atol=2e-3), (loss, ref_bf16)
    assert jnp.allclose(loss, ref_f32, rtol=3e-2, atol=3e-2), (loss, ref_f32)

    # 2) Forced small tile + 2-way split: exercises multi-step accumulation,
    #    interior (unmasked) tiles, tail masking and fully-padded tiles.
    loss2, _, _ = dhn_loss(u, y, ind, U, Y, alpha=alpha, tn=128, n_split=2)
    loss2 = jax.block_until_ready(loss2)
    assert jnp.allclose(loss2, ref_bf16, rtol=2e-3, atol=2e-3), (loss2, ref_bf16)

    # Buffer-update side effect (module state).
    assert jnp.allclose(U_new[ind], u) and jnp.allclose(Y_new[ind], y)

    print("KERNEL_OK")
</pallas_src>

<mosaic_0001>
module attributes {stable_mosaic.version = 11 : i64} {
  func.func @_dhn_loss_kernel(%arg0: i32, %arg1: i32, %arg2: memref<8x32xf32, #tpu.memory_space<vmem>>, %arg3: memref<8x16xbf16, #tpu.memory_space<vmem>>, %arg4: memref<32x640xbf16, #tpu.memory_space<vmem>>, %arg5: memref<16x640xbf16, #tpu.memory_space<vmem>>, %arg6: memref<1x8x128xf32, #tpu.memory_space<vmem>>, %arg7: memref<8x640xf32, #tpu.memory_space<vmem>>) attributes {dimension_semantics = [#tpu.dimension_semantics<parallel>, #tpu.dimension_semantics<arbitrary>], iteration_bounds = array<i64: 1, 1>, scalar_prefetch = 0 : i64, scratch_operands = 1 : i64, tpu.core_type = #tpu.core_type<tc>, window_params = [{pipeline_mode = #tpu.pipeline_mode<synchronous>, transform_indices = @transform_0, window_bounds = array<i64: 8, 32>}, {pipeline_mode = #tpu.pipeline_mode<synchronous>, transform_indices = @transform_1, window_bounds = array<i64: 8, 16>}, {transform_indices = @transform_2, window_bounds = array<i64: 32, 640>}, {transform_indices = @transform_3, window_bounds = array<i64: 16, 640>}, {transform_indices = @transform_4, window_bounds = array<i64: 1, 8, 128>}]} {
    %c0_i32 = arith.constant 0 : i32
    %0 = arith.cmpi eq, %arg1, %c0_i32 : i32
    %1 = arith.extui %0 : i1 to i32
    %c0_i32_0 = arith.constant 0 : i32
    %2 = arith.cmpi ne, %1, %c0_i32_0 : i32
    scf.if %2 {
      %cst_18 = arith.constant 0.000000e+00 : f32
      %39 = vector.broadcast %cst_18 : f32 to vector<8x640xf32>
      %c0_19 = arith.constant 0 : index
      %c0_20 = arith.constant 0 : index
      %40 = vector.load %arg7[%c0_19, %c0_20] : memref<8x640xf32, #tpu.memory_space<vmem>>, vector<8x640xf32>
      tpu.vector_store %arg7[%c0_19, %c0_20], %39 {strides = array<i32>} : memref<8x640xf32, #tpu.memory_space<vmem>>, vector<8x640xf32>,
    } else {
    }
    %c0 = arith.constant 0 : index
    %c0_1 = arith.constant 0 : index
    %3 = vector.load %arg2[%c0, %c0_1] : memref<8x32xf32, #tpu.memory_space<vmem>>, vector<8x32xf32>
    %4 = arith.truncf %3 : vector<8x32xf32> to vector<8x32xbf16>
    %c0_2 = arith.constant 0 : index
    %c0_3 = arith.constant 0 : index
    %5 = vector.load %arg3[%c0_2, %c0_3] : memref<8x16xbf16, #tpu.memory_space<vmem>>, vector<8x16xbf16>
    %c0_4 = arith.constant 0 : index
    %c0_5 = arith.constant 0 : index
    %6 = vector.load %arg4[%c0_4, %c0_5] : memref<32x640xbf16, #tpu.memory_space<vmem>>, vector<32x640xbf16>
    %c0_6 = arith.constant 0 : index
    %c0_7 = arith.constant 0 : index
    %7 = vector.load %arg5[%c0_6, %c0_7] : memref<16x640xbf16, #tpu.memory_space<vmem>>, vector<16x640xbf16>
    %cst = arith.constant dense<0.000000e+00> : vector<8x640xf32>
    %8 = tpu.matmul %4, %6, %cst {dimension_numbers = #tpu.dot_dimension_numbers<[1], [0], [0], [1], [0, 0, 1, 1], [], []>} : vector<8x32xbf16>, vector<32x640xbf16>, vector<8x640xf32> -> vector<8x640xf32>
    %cst_8 = arith.constant 5.000000e-01 : f32
    %9 = vector.broadcast %cst_8 : f32 to vector<8x640xf32>
    %10 = arith.mulf %8, %9 : vector<8x640xf32>
    %cst_9 = arith.constant dense<0.000000e+00> : vector<8x640xf32>
    %11 = tpu.matmul %5, %7, %cst_9 {dimension_numbers = #tpu.dot_dimension_numbers<[1], [0], [0], [1], [0, 0, 1, 1], [], []>} : vector<8x16xbf16>, vector<16x640xbf16>, vector<8x640xf32> -> vector<8x640xf32>
    %cst_10 = arith.constant 0.000000e+00 : f32
    %12 = vector.broadcast %cst_10 : f32 to vector<8x640xf32>
    %13 = arith.cmpf ogt, %11, %12 : vector<8x640xf32>
    %14 = arith.extui %13 : vector<8x640xi1> to vector<8x640xi32>
    %15 = arith.sitofp %14 : vector<8x640xi32> to vector<8x640xf32>
    %16 = math.absf %10 : vector<8x640xf32>
    %cst_11 = arith.constant 0.000000e+00 : f32
    %17 = vector.broadcast %cst_11 : f32 to vector<8x640xf32>
    %18 = arith.subf %17, %16 : vector<8x640xf32>
    %19 = math.exp %18 : vector<8x640xf32>
    %20 = math.log1p %19 : vector<8x640xf32>
    %cst_12 = arith.constant 0.000000e+00 : f32
    %21 = vector.broadcast %cst_12 : f32 to vector<8x640xf32>
    %22 = arith.maximumf %10, %21 : vector<8x640xf32>
    %23 = arith.addf %20, %22 : vector<8x640xf32>
    %24 = arith.mulf %15, %10 : vector<8x640xf32>
    %25 = arith.subf %23, %24 : vector<8x640xf32>
    %c1_i32 = arith.constant 1 : i32
    %26 = arith.muli %arg0, %c1_i32 : i32
    %27 = arith.addi %26, %arg1 : i32
    %c640_i32 = arith.constant 640 : i32
    %28 = arith.muli %27, %c640_i32 : i32
    %c640_i32_13 = arith.constant 640 : i32
    %29 = arith.addi %28, %c640_i32_13 : i32
    %c600_i32 = arith.constant 600 : i32
    %30 = arith.cmpi sgt, %29, %c600_i32 : i32
    %true = arith.constant true
    %31 = arith.xori %30, %true : i1
    %32 = arith.extui %31 : i1 to i32
    %c0_i32_14 = arith.constant 0 : i32
    %33 = arith.cmpi ne, %32, %c0_i32_14 : i32
    scf.if %33 {
      %c0_18 = arith.constant 0 : index
      %c0_19 = arith.constant 0 : index
      %39 = vector.load %arg7[%c0_18, %c0_19] : memref<8x640xf32, #tpu.memory_space<vmem>>, vector<8x640xf32>
      %40 = arith.addf %39, %25 : vector<8x640xf32>
      %c0_20 = arith.constant 0 : index
      %c0_21 = arith.constant 0 : index
      %41 = vector.load %arg7[%c0_20, %c0_21] : memref<8x640xf32, #tpu.memory_space<vmem>>, vector<8x640xf32>
      tpu.vector_store %arg7[%c0_20, %c0_21], %40 {strides = array<i32>} : memref<8x640xf32, #tpu.memory_space<vmem>>, vector<8x640xf32>,
    } else {
    }
    %34 = arith.extui %30 : i1 to i32
    %c0_i32_15 = arith.constant 0 : i32
    %35 = arith.cmpi ne, %34, %c0_i32_15 : i32
    scf.if %35 {
      %39 = tpu.iota {dimensions = array<i32: 1>} : vector<8x640xi32>
      %c600_i32_18 = arith.constant 600 : i32
      %40 = arith.subi %c600_i32_18, %28 : i32
      %41 = vector.broadcast %40 : i32 to vector<8x640xi32>
      %42 = arith.cmpi slt, %39, %41 : vector<8x640xi32>
      %c0_19 = arith.constant 0 : index
      %c0_20 = arith.constant 0 : index
      %43 = vector.load %arg7[%c0_19, %c0_20] : memref<8x640xf32, #tpu.memory_space<vmem>>, vector<8x640xf32>
      %cst_21 = arith.constant 0.000000e+00 : f32
      %44 = vector.broadcast %cst_21 : f32 to vector<8x640xf32>
      %45 = arith.select %42, %25, %44 : vector<8x640xi1>, vector<8x640xf32>
      %46 = arith.addf %43, %45 : vector<8x640xf32>
      %c0_22 = arith.constant 0 : index
      %c0_23 = arith.constant 0 : index
      %47 = vector.load %arg7[%c0_22, %c0_23] : memref<8x640xf32, #tpu.memory_space<vmem>>, vector<8x640xf32>
      tpu.vector_store %arg7[%c0_22, %c0_23], %46 {strides = array<i32>} : memref<8x640xf32, #tpu.memory_space<vmem>>, vector<8x640xf32>,
    } else {
    }
    %c0_i32_16 = arith.constant 0 : i32
    %36 = arith.cmpi eq, %arg1, %c0_i32_16 : i32
    %37 = arith.extui %36 : i1 to i32
    %c0_i32_17 = arith.constant 0 : i32
    %38 = arith.cmpi ne, %37, %c0_i32_17 : i32
    scf.if %38 {
      %c0_18 = arith.constant 0 : index
      %c0_19 = arith.constant 0 : index
      %39 = vector.load %arg7[%c0_18, %c0_19] : memref<8x640xf32, #tpu.memory_space<vmem>>, vector<8x640xf32>
      %40 = vector.shape_cast %39 : vector<8x640xf32> to vector<1x8x640xf32>
      %cst_20 = arith.constant dense<0.000000e+00> : vector<1xf32>
      %41 = vector.multi_reduction <add>, %40, %cst_20 [1, 2] : vector<1x8x640xf32> to vector<1xf32>
      %42 = vector.shape_cast %41 : vector<1xf32> to vector<1x1x1xf32>
      %43 = vector.extract %42[0, 0, 0] : f32 from vector<1x1x1xf32>
      %cst_21 = arith.constant 4.800000e+03 : f32
      %44 = arith.divf %43, %cst_21 : f32
      %45 = math.absf %3 : vector<8x32xf32>
      %cst_22 = arith.constant 1.000000e+00 : f32
      %46 = vector.broadcast %cst_22 : f32 to vector<8x32xf32>
      %47 = arith.subf %45, %46 : vector<8x32xf32>
      %48 = math.absf %47 : vector<8x32xf32>
      %49 = vector.shape_cast %48 : vector<8x32xf32> to vector<1x8x32xf32>
      %cst_23 = arith.constant dense<0.000000e+00> : vector<1xf32>
      %50 = vector.multi_reduction <add>, %49, %cst_23 [1, 2] : vector<1x8x32xf32> to vector<1xf32>
      %51 = vector.shape_cast %50 : vector<1xf32> to vector<1x1x1xf32>
      %52 = vector.extract %51[0, 0, 0] : f32 from vector<1x1x1xf32>
      %cst_24 = arith.constant 2.560000e+02 : f32
      %53 = arith.divf %52, %cst_24 : f32
      %cst_25 = arith.constant 1.000000e-01 : f32
      %54 = arith.mulf %cst_25, %53 : f32
      %c0_i32_26 = arith.constant 0 : i32
      %55 = arith.cmpi eq, %arg0, %c0_i32_26 : i32
      %cst_27 = arith.constant 0.000000e+00 : f32
      %56 = arith.select %55, %54, %cst_27 : f32
      %57 = arith.addf %44, %56 : f32
      %58 = vector.broadcast %57 : f32 to vector<1x8x128xf32>
      %c0_28 = arith.constant 0 : index
      %c0_29 = arith.constant 0 : index
      %c0_30 = arith.constant 0 : index
      %59 = vector.load %arg6[%c0_28, %c0_29, %c0_30] : memref<1x8x128xf32, #tpu.memory_space<vmem>>, vector<1x8x128xf32>
      tpu.vector_store %arg6[%c0_28, %c0_29, %c0_30], %58 {strides = array<i32>} : memref<1x8x128xf32, #tpu.memory_space<vmem>>, vector<1x8x128xf32>,
    } else {
    }
    return
  }
  func.func @transform_0(%arg0: i32, %arg1: i32) -> (i32, i32) {
    %c0_i32 = arith.constant 0 : i32
    %c0_i32_0 = arith.constant 0 : i32
    %c0_i32_1 = arith.constant 0 : i32
    return %c0_i32, %c0_i32_0 : i32, i32
  }
  func.func @transform_1(%arg0: i32, %arg1: i32) -> (i32, i32) {
    %c0_i32 = arith.constant 0 : i32
    %c0_i32_0 = arith.constant 0 : i32
    %c0_i32_1 = arith.constant 0 : i32
    return %c0_i32, %c0_i32_0 : i32, i32
  }
  func.func @transform_2(%arg0: i32, %arg1: i32) -> (i32, i32) {
    %c1_i32 = arith.constant 1 : i32
    %0 = arith.muli %arg0, %c1_i32 : i32
    %1 = arith.addi %0, %arg1 : i32
    %c0_i32 = arith.constant 0 : i32
    %c0_i32_0 = arith.constant 0 : i32
    return %c0_i32, %1 : i32, i32
  }
  func.func @transform_3(%arg0: i32, %arg1: i32) -> (i32, i32) {
    %c1_i32 = arith.constant 1 : i32
    %0 = arith.muli %arg0, %c1_i32 : i32
    %1 = arith.addi %0, %arg1 : i32
    %c0_i32 = arith.constant 0 : i32
    %c0_i32_0 = arith.constant 0 : i32
    return %c0_i32, %1 : i32, i32
  }
  func.func @transform_4(%arg0: i32, %arg1: i32) -> (i32, i32, i32) {
    %c0_i32 = arith.constant 0 : i32
    %c0_i32_0 = arith.constant 0 : i32
    %c0_i32_1 = arith.constant 0 : i32
    return %arg0, %c0_i32, %c0_i32_0 : i32, i32, i32
  }
}

</mosaic_0001>

<llo_original>
// kernel: tpu_custom_call.1
$region0: #{tpu_custom_call.1}
  #allocation0 [shape = 'u32[]', space=smem, size = 0x4, offset = 0x4, fixed_abs, tag = 'smem constant byte address 0x4 - core index']
  #allocation1 [shape = 'u32[144,128]{1,0:T(1,128)}', space=vmem, size = 0x12000, scoped, tag = 'internal scratch']
  #allocation2 [shape = 'f32[8,640]{1,0:T(8,128)}', space=vmem, size = 0x5000, scoped, tag = 'scratch operand']
  %s0 = inlined_call_operand.hbm [shape: f32[8,32], index: 0, kind: input, shape index: {}]
  %s1 = inlined_call_operand.hbm [shape: bf16[8,16], index: 1, kind: input, shape index: {}]
  %s2 = inlined_call_operand.hbm [shape: bf16[32,640], index: 2, kind: input, shape index: {}]
  %s3 = inlined_call_operand.hbm [shape: bf16[16,640], index: 3, kind: input, shape index: {}]
  %s4 = inlined_call_operand.hbm [shape: f32[1,8,128], index: 4, kind: output, shape index: {}]
  %s5 = sld [smem:[#allocation0]]
  $region58: #{tpu_custom_call.1} parent=0
    _
  %s7 = ssub.s32 1, %s5
  %s8 = scalar_select 0, %s7, %s5
  $region1: #{tpu_custom_call.1} parent=0
    #allocation3 [shape = 'u8[4096]{0}', space=vmem, size = 0x1000, scoped, tag = 'input window, operand 0, single buffered']
    #allocation4 [shape = 's32[1]{0}', space=sflag, size = 0x4, scoped, tag = 'scoped memory for tpu_custom_call.1']
    #allocation5 [shape = 's32[1]{0}', space=sflag, size = 0x4, scoped, tag = 'scoped memory for tpu_custom_call.1']
    #allocation6 [shape = 'u8[2048]{0}', space=vmem, size = 0x800, scoped, tag = 'input window, operand 1, single buffered']
    #allocation7 [shape = 's32[1]{0}', space=sflag, size = 0x4, scoped, tag = 'scoped memory for tpu_custom_call.1']
    #allocation8 [shape = 'u8[40960]{0}', space=vmem, size = 0xa000, scoped, tag = 'input window, operand 2, single buffered']
    #allocation9 [shape = 'u8[20480]{0}', space=vmem, size = 0x5000, scoped, tag = 'input window, operand 3, single buffered']
    #allocation10 [shape = 's32[1]{0}', space=sflag, size = 0x4, scoped, tag = 'scoped memory for tpu_custom_call.1']
    #allocation11 [shape = 'u8[4096]{0}', space=vmem, size = 0x1000, scoped, tag = 'output window, operand 0, single buffered']
    %9 = vsyncpa [#allocation4], 0
    %10 = vsyncpa [#allocation7], 0
    %11 = vsyncpa [#allocation10], 0
    %12 = vsyncpa [#allocation5], 0
    // Predicated region
    $region2: #{tpu_custom_call.1} parent=1 // pred_check
      _
    $region3: #{tpu_custom_call.1} parent=1 // pred_check_branch
      %14 = sbr.rel (0) target = $region5
    $region4: #{tpu_custom_call.1} parent=1 // pred_region
      %s16 = ssub.s32 128, 128
      %17 = vsyncadd [#allocation4], %s16
      %s19 = sshll.u32 [#allocation3], 4
      %s20 = int_to_ptr.vmem [resolvable:$true] %s19
      %22 = dma.hbm_to_vmem [thread:$0]  %s0, 128, %s20, [#allocation4]
    $region5: #{tpu_custom_call.1} parent=1 // pred_fallthru
      _
    // Predicated region
    $region6: #{tpu_custom_call.1} parent=1 // pred_check
      _
    $region7: #{tpu_custom_call.1} parent=1 // pred_check_branch
      %24 = sbr.rel (0) target = $region9
    $region8: #{tpu_custom_call.1} parent=1 // pred_region
      %s26 = ssub.s32 64, 64
      %27 = vsyncadd [#allocation7], %s26
      %s29 = sshll.u32 [#allocation6], 4
      %s30 = int_to_ptr.vmem [resolvable:$true] %s29
      %32 = dma.hbm_to_vmem [thread:$0]  %s1, 64, %s30, [#allocation7]
    $region9: #{tpu_custom_call.1} parent=1 // pred_fallthru
      _
    // Predicated region
    $region10: #{tpu_custom_call.1} parent=1 // pred_check
      _
    $region11: #{tpu_custom_call.1} parent=1 // pred_check_branch
      %34 = sbr.rel (0) target = $region13
    $region12: #{tpu_custom_call.1} parent=1 // pred_region
      %s35 = sadd.s32 0, 0
      %s36 = smul.u32 5, %s35
      %s38 = ssub.s32 1280, 1280
      %39 = vsyncadd [#allocation7], %s38
      %s40 = smul.addr %s36, 64
      %s41 = scalar_lea.hbm %s2, %s40
      %s42 = sshll.u32 [#allocation8], 4
      %s43 = int_to_ptr.vmem [resolvable:$true] %s42
      %48 = dma.hbm_to_vmem [thread:$0]  %s41, 1280, %s43, [#allocation7], 320, 320, 20
    $region13: #{tpu_custom_call.1} parent=1 // pred_fallthru
      _
    // Predicated region
    $region14: #{tpu_custom_call.1} parent=1 // pred_check
      _
    $region15: #{tpu_custom_call.1} parent=1 // pred_check_branch
      %50 = sbr.rel (0) target = $region17
    $region16: #{tpu_custom_call.1} parent=1 // pred_region
      %s51 = sadd.s32 0, 0
      %s52 = smul.u32 5, %s51
      %s54 = ssub.s32 640, 640
      %55 = vsyncadd [#allocation10], %s54
      %s56 = smul.addr %s52, 64
      %s57 = scalar_lea.hbm %s3, %s56
      %s58 = sshll.u32 [#allocation9], 4
      %s59 = int_to_ptr.vmem [resolvable:$true] %s58
      %64 = dma.hbm_to_vmem [thread:$0]  %s57, 640, %s59, [#allocation10], 320, 320, 20
    $region17: #{tpu_custom_call.1} parent=1 // pred_fallthru
      _
    // Predicated region
    $region18: #{tpu_custom_call.1} parent=1 // pred_check
      _
    $region19: #{tpu_custom_call.1} parent=1 // pred_check_branch
      %66 = sbr.rel (0) target = $region21
    $region20: #{tpu_custom_call.1} parent=1 // pred_region
      %67 = dma.done [#allocation4], 128
    $region21: #{tpu_custom_call.1} parent=1 // pred_fallthru
      _
    // Predicated region
    $region22: #{tpu_custom_call.1} parent=1 // pred_check
      _
    $region23: #{tpu_custom_call.1} parent=1 // pred_check_branch
      %69 = sbr.rel (0) target = $region25
    $region24: #{tpu_custom_call.1} parent=1 // pred_region
      %70 = dma.done [#allocation7], 64
    $region25: #{tpu_custom_call.1} parent=1 // pred_fallthru
      _
    // Predicated region
    $region26: #{tpu_custom_call.1} parent=1 // pred_check
      _
    $region27: #{tpu_custom_call.1} parent=1 // pred_check_branch
      %72 = sbr.rel (0) target = $region29
    $region28: #{tpu_custom_call.1} parent=1 // pred_region
      %73 = dma.done [#allocation7], 1280
    $region29: #{tpu_custom_call.1} parent=1 // pred_fallthru
      _
    // Predicated region
    $region30: #{tpu_custom_call.1} parent=1 // pred_check
      _
    $region31: #{tpu_custom_call.1} parent=1 // pred_check_branch
      %75 = sbr.rel (0) target = $region33
    $region32: #{tpu_custom_call.1} parent=1 // pred_region
      %76 = dma.done [#allocation10], 640
    $region33: #{tpu_custom_call.1} parent=1 // pred_fallthru
      _
    %s77 = sadd.s32 0, 0
    %s78 = smul.u32 5, %s77
    %s79 = sadd.s32 0, 0
    %s80 = smul.u32 5, %s79
    %p82 = scmp.eq.s32.totalorder 0, 0
    // Predicated region
    $region34: #{tpu_custom_call.1} parent=1 // pred_check
      %p83 = pneg %p82
    $region35: #{tpu_custom_call.1} parent=1 // pred_check_branch
      %85 = sbr.rel (%p83) target = $region37
    $region36: #{tpu_custom_call.1} parent=1 // pred_region
      %86 = vst [vmem:[#allocation2] sm:$0xff] 0.0
      %87 = vst [vmem:[#allocation2 + $0x8] sm:$0xff] 0.0
      %88 = vst [vmem:[#allocation2 + $0x10] sm:$0xff] 0.0
      %89 = vst [vmem:[#allocation2 + $0x18] sm:$0xff] 0.0
      %90 = vst [vmem:[#allocation2 + $0x20] sm:$0xff] 0.0
    $region37: #{tpu_custom_call.1} parent=1 // pred_fallthru
      _
    %v91 = vld [vmem:[#allocation3] sm:$0xff]
    %v92 = vpack.c.bf16 %v91, %v91
    %v93 = vld [vmem:[#allocation6] sm:$0xf]
    %v94 = vld [vmem:[#allocation8] sm:$0xff]
    %v95 = vld [vmem:[#allocation8 + $0x8] sm:$0xff]
    %v96 = vld [vmem:[#allocation8 + $0x10] sm:$0xf]
    %v97 = vld [vmem:[#allocation8 + $0x14] sm:$0xff]
    %v98 = vld [vmem:[#allocation8 + $0x1c] sm:$0xff]
    %v99 = vld [vmem:[#allocation8 + $0x24] sm:$0xf]
    %v100 = vld [vmem:[#allocation8 + $0x28] sm:$0xff]
    %v101 = vld [vmem:[#allocation8 + $0x30] sm:$0xff]
    %v102 = vld [vmem:[#allocation8 + $0x38] sm:$0xf]
    %v103 = vld [vmem:[#allocation8 + $0x3c] sm:$0xff]
    %v104 = vld [vmem:[#allocation8 + $0x44] sm:$0xff]
    %v105 = vld [vmem:[#allocation8 + $0x4c] sm:$0xf]
    %v106 = vld [vmem:[#allocation9] sm:$0xff]
    %v107 = vld [vmem:[#allocation9 + $0x8] sm:$0xff]
    %v108 = vld [vmem:[#allocation9 + $0x10] sm:$0xf]
    %v109 = vld [vmem:[#allocation9 + $0x14] sm:$0xff]
    %v110 = vld [vmem:[#allocation9 + $0x1c] sm:$0xff]
    %v111 = vld [vmem:[#allocation9 + $0x24] sm:$0xf]
    %v124 = vunpack.c.l.b16 %v94
    %v125 = vunpack.c.h.b16 %v94
    %v126 = vunpack.c.l.b16 %v95
    %v127 = vunpack.c.h.b16 %v95
    %v128 = vunpack.c.l.b16 %v96
    %v129 = vunpack.c.l.b16 %v97
    %v130 = vunpack.c.h.b16 %v97
    %v131 = vunpack.c.l.b16 %v98
    %v132 = vunpack.c.h.b16 %v98
    %v133 = vunpack.c.l.b16 %v99
    %v134 = vunpack.c.l.b16 %v100
    %v135 = vunpack.c.h.b16 %v100
    %v136 = vunpack.c.l.b16 %v101
    %v137 = vunpack.c.h.b16 %v101
    %v138 = vunpack.c.l.b16 %v102
    %v139 = vunpack.c.l.b16 %v103
    %v140 = vunpack.c.h.b16 %v103
    %v141 = vunpack.c.l.b16 %v104
    %v142 = vunpack.c.h.b16 %v104
    %v143 = vunpack.c.l.b16 %v105
    %v144 = vpack.c.b16 %v129, %v124
    %v145 = vpack.c.b16 %v130, %v125
    %v146 = vpack.c.b16 %v131, %v126
    %v147 = vpack.c.b16 %v132, %v127
    %v148 = vpack.c.b16 %v133, %v128
    %v149 = vpack.c.b16 %v139, %v134
    %v150 = vpack.c.b16 %v140, %v135
    %v151 = vpack.c.b16 %v141, %v136
    %v152 = vpack.c.b16 %v142, %v137
    %v153 = vpack.c.b16 %v143, %v138
    %vm164 = vcmask 261120
    %v166 = vsel %vm164, %v92, 0
    %168 = vmatprep.subr.bf16.mxu0 %v145
    %169 = vmatpush1.bf16.msra.mxu0 %v144
    %170 = vmatprep.subr.bf16.mxu0 %v150
    %171 = vmatpush1.bf16.msra.mxu0 %v149
    %172 = vmatprep.subr.bf16.mxu0 0
    %173 = vmatpush1.bf16.msra.mxu0 0
    %174 = vmatprep.subr.bf16.mxu0 0
    %175 = vmatpush1.bf16.msra.mxu0 0
    %176 = vmatprep.subr.bf16.mxu0 0
    %177 = vmatpush1.bf16.msra.mxu0 0
    %178 = vmatprep.subr.bf16.mxu0 0
    %179 = vmatpush1.bf16.msra.mxu0 0
    %180 = vmatprep.subr.bf16.mxu0 0
    %181 = vmatpush1.bf16.msra.mxu0 0
    %182 = vmatprep.subr.bf16.mxu0 0
    %183 = vmatpush1.bf16.msra.mxu0 0
    %184 = vmatprep.subr.bf16.mxu0 0
    %185 = vmatpush1.bf16.msra.mxu0 0
    %186 = vmatprep.subr.bf16.mxu0 0
    %187 = vmatpush1.bf16.msra.mxu0 0
    %188 = vmatprep.subr.bf16.mxu0 0
    %189 = vmatpush1.bf16.msra.mxu0 0
    %190 = vmatprep.subr.bf16.mxu0 0
    %191 = vmatpush1.bf16.msra.mxu0 0
    %192 = vmatprep.subr.bf16.mxu0 0
    %193 = vmatpush1.bf16.msra.mxu0 0
    %194 = vmatprep.subr.bf16.mxu0 0
    %195 = vmatpush1.bf16.msra.mxu0 0
    %196 = vmatprep.subr.bf16.mxu0 0
    %197 = vmatpush1.bf16.msra.mxu0 0
    %198 = vmatprep.subr.bf16.mxu0 0
    %199 = vmatpush1.bf16.msra.mxu0 0
    %200 = vmatprep.mubr.bf16.mxu0 0
    %201 = vmatmul.mubr.bf16.gmra.mrb[0].mxu0 %v166
    %v202 = vpop.f32.mrb[0].mxu0
    %v203 = vadd.f32 0.0, %v202
    %v204 = vpop.f32.mrb[0].mxu0
    %v205 = vadd.f32 0.0, %v204
    %v206 = vpop.f32.mrb[0].mxu0
    %v207 = vpop.f32.mrb[0].mxu0
    %208 = vdwg.mxu0
    %209 = vmatprep.subr.bf16.mxu0 %v147
    %210 = vmatpush1.bf16.msra.mxu0 %v146
    %211 = vmatprep.subr.bf16.mxu0 %v152
    %212 = vmatpush1.bf16.msra.mxu0 %v151
    %213 = vmatprep.subr.bf16.mxu0 0
    %214 = vmatpush1.bf16.msra.mxu0 0
    %215 = vmatprep.subr.bf16.mxu0 0
    %216 = vmatpush1.bf16.msra.mxu0 0
    %217 = vmatprep.subr.bf16.mxu0 0
    %218 = vmatpush1.bf16.msra.mxu0 0
    %219 = vmatprep.subr.bf16.mxu0 0
    %220 = vmatpush1.bf16.msra.mxu0 0
    %221 = vmatprep.subr.bf16.mxu0 0
    %222 = vmatpush1.bf16.msra.mxu0 0
    %223 = vmatprep.subr.bf16.mxu0 0
    %224 = vmatpush1.bf16.msra.mxu0 0
    %225 = vmatprep.subr.bf16.mxu0 0
    %226 = vmatpush1.bf16.msra.mxu0 0
    %227 = vmatprep.subr.bf16.mxu0 0
    %228 = vmatpush1.bf16.msra.mxu0 0
    %229 = vmatprep.subr.bf16.mxu0 0
    %230 = vmatpush1.bf16.msra.mxu0 0
    %231 = vmatprep.subr.bf16.mxu0 0
    %232 = vmatpush1.bf16.msra.mxu0 0
    %233 = vmatprep.subr.bf16.mxu0 0
    %234 = vmatpush1.bf16.msra.mxu0 0
    %235 = vmatprep.subr.bf16.mxu0 0
    %236 = vmatpush1.bf16.msra.mxu0 0
    %237 = vmatprep.subr.bf16.mxu0 0
    %238 = vmatpush1.bf16.msra.mxu0 0
    %239 = vmatprep.subr.bf16.mxu0 0
    %240 = vmatpush1.bf16.msra.mxu0 0
    %241 = vmatprep.mubr.bf16.mxu0 0
    %242 = vmatmul.mubr.bf16.gmra.mrb[0].mxu0 %v166
    %v243 = vpop.f32.mrb[0].mxu0
    %v244 = vadd.f32 0.0, %v243
    %v245 = vpop.f32.mrb[0].mxu0
    %v246 = vadd.f32 0.0, %v245
    %v247 = vpop.f32.mrb[0].mxu0
    %v248 = vpop.f32.mrb[0].mxu0
    %249 = vdwg.mxu0
    %250 = vmatprep.subr.bf16.mxu0 0
    %251 = vmatpush1.bf16.msra.mxu0 %v148
    %252 = vmatprep.subr.bf16.mxu0 0
    %253 = vmatpush1.bf16.msra.mxu0 %v153
    %254 = vmatprep.subr.bf16.mxu0 0
    %255 = vmatpush1.bf16.msra.mxu0 0
    %256 = vmatprep.subr.bf16.mxu0 0
    %257 = vmatpush1.bf16.msra.mxu0 0
    %258 = vmatprep.subr.bf16.mxu0 0
    %259 = vmatpush1.bf16.msra.mxu0 0
    %260 = vmatprep.subr.bf16.mxu0 0
    %261 = vmatpush1.bf16.msra.mxu0 0
    %262 = vmatprep.subr.bf16.mxu0 0
    %263 = vmatpush1.bf16.msra.mxu0 0
    %264 = vmatprep.subr.bf16.mxu0 0
    %265 = vmatpush1.bf16.msra.mxu0 0
    %266 = vmatprep.subr.bf16.mxu0 0
    %267 = vmatpush1.bf16.msra.mxu0 0
    %268 = vmatprep.subr.bf16.mxu0 0
    %269 = vmatpush1.bf16.msra.mxu0 0
    %270 = vmatprep.subr.bf16.mxu0 0
    %271 = vmatpush1.bf16.msra.mxu0 0
    %272 = vmatprep.subr.bf16.mxu0 0
    %273 = vmatpush1.bf16.msra.mxu0 0
    %274 = vmatprep.subr.bf16.mxu0 0
    %275 = vmatpush1.bf16.msra.mxu0 0
    %276 = vmatprep.subr.bf16.mxu0 0
    %277 = vmatpush1.bf16.msra.mxu0 0
    %278 = vmatprep.subr.bf16.mxu0 0
    %279 = vmatpush1.bf16.msra.mxu0 0
    %280 = vmatprep.subr.bf16.mxu0 0
    %281 = vmatpush1.bf16.msra.mxu0 0
    %282 = vmatprep.mubr.bf16.mxu0 0
    %283 = vmatmul.mubr.bf16.gmra.mrb[0].mxu0 %v166
    %v284 = vpop.f32.mrb[0].mxu0
    %v285 = vadd.f32 0.0, %v284
    %v286 = vpop.f32.mrb[0].mxu0
    %v287 = vpop.f32.mrb[0].mxu0
    %v288 = vpop.f32.mrb[0].mxu0
    %289 = vdwg.mxu0
    %v290 = vmul.f32 %v203, 0.5
    %v291 = vmul.f32 %v205, 0.5
    %v292 = vmul.f32 %v244, 0.5
    %v293 = vmul.f32 %v246, 0.5
    %v294 = vmul.f32 %v285, 0.5
    %v301 = vunpack.c.l.b16 %v106
    %v302 = vunpack.c.h.b16 %v106
    %v303 = vunpack.c.l.b16 %v107
    %v304 = vunpack.c.h.b16 %v107
    %v305 = vunpack.c.l.b16 %v108
    %v306 = vunpack.c.l.b16 %v109
    %v307 = vunpack.c.h.b16 %v109
    %v308 = vunpack.c.l.b16 %v110
    %v309 = vunpack.c.h.b16 %v110
    %v310 = vunpack.c.l.b16 %v111
    %v311 = vpack.c.b16 %v306, %v301
    %v312 = vpack.c.b16 %v307, %v302
    %v313 = vpack.c.b16 %v308, %v303
    %v314 = vpack.c.b16 %v309, %v304
    %v315 = vpack.c.b16 %v310, %v305
    %vm321 = vcmask 130048
    %v323 = vsel %vm321, %v93, 0
    %325 = vmatprep.subr.bf16.mxu0 %v312
    %326 = vmatpush1.bf16.msra.mxu0 %v311
    %327 = vmatprep.subr.bf16.mxu0 0
    %328 = vmatpush1.bf16.msra.mxu0 0
    %329 = vmatprep.subr.bf16.mxu0 0
    %330 = vmatpush1.bf16.msra.mxu0 0
    %331 = vmatprep.subr.bf16.mxu0 0
    %332 = vmatpush1.bf16.msra.mxu0 0
    %333 = vmatprep.subr.bf16.mxu0 0
    %334 = vmatpush1.bf16.msra.mxu0 0
    %335 = vmatprep.subr.bf16.mxu0 0
    %336 = vmatpush1.bf16.msra.mxu0 0
    %337 = vmatprep.subr.bf16.mxu0 0
    %338 = vmatpush1.bf16.msra.mxu0 0
    %339 = vmatprep.subr.bf16.mxu0 0
    %340 = vmatpush1.bf16.msra.mxu0 0
    %341 = vmatprep.subr.bf16.mxu0 0
    %342 = vmatpush1.bf16.msra.mxu0 0
    %343 = vmatprep.subr.bf16.mxu0 0
    %344 = vmatpush1.bf16.msra.mxu0 0
    %345 = vmatprep.subr.bf16.mxu0 0
    %346 = vmatpush1.bf16.msra.mxu0 0
    %347 = vmatprep.subr.bf16.mxu0 0
    %348 = vmatpush1.bf16.msra.mxu0 0
    %349 = vmatprep.subr.bf16.mxu0 0
    %350 = vmatpush1.bf16.msra.mxu0 0
    %351 = vmatprep.subr.bf16.mxu0 0
    %352 = vmatpush1.bf16.msra.mxu0 0
    %353 = vmatprep.subr.bf16.mxu0 0
    %354 = vmatpush1.bf16.msra.mxu0 0
    %355 = vmatprep.subr.bf16.mxu0 0
    %356 = vmatpush1.bf16.msra.mxu0 0
    %357 = vmatprep.mubr.bf16.mxu0 0
    %358 = vmatmul.mubr.bf16.gmra.mrb[0].mxu0 %v323
    %v359 = vpop.f32.mrb[0].mxu0
    %v360 = vadd.f32 0.0, %v359
    %v361 = vpop.f32.mrb[0].mxu0
    %v362 = vadd.f32 0.0, %v361
    %v363 = vpop.f32.mrb[0].mxu0
    %v364 = vpop.f32.mrb[0].mxu0
    %365 = vdwg.mxu0
    %366 = vmatprep.subr.bf16.mxu0 %v314
    %367 = vmatpush1.bf16.msra.mxu0 %v313
    %368 = vmatprep.subr.bf16.mxu0 0
    %369 = vmatpush1.bf16.msra.mxu0 0
    %370 = vmatprep.subr.bf16.mxu0 0
    %371 = vmatpush1.bf16.msra.mxu0 0
    %372 = vmatprep.subr.bf16.mxu0 0
    %373 = vmatpush1.bf16.msra.mxu0 0
    %374 = vmatprep.subr.bf16.mxu0 0
    %375 = vmatpush1.bf16.msra.mxu0 0
    %376 = vmatprep.subr.bf16.mxu0 0
    %377 = vmatpush1.bf16.msra.mxu0 0
    %378 = vmatprep.subr.bf16.mxu0 0
    %379 = vmatpush1.bf16.msra.mxu0 0
    %380 = vmatprep.subr.bf16.mxu0 0
    %381 = vmatpush1.bf16.msra.mxu0 0
    %382 = vmatprep.subr.bf16.mxu0 0
    %383 = vmatpush1.bf16.msra.mxu0 0
    %384 = vmatprep.subr.bf16.mxu0 0
    %385 = vmatpush1.bf16.msra.mxu0 0
    %386 = vmatprep.subr.bf16.mxu0 0
    %387 = vmatpush1.bf16.msra.mxu0 0
    %388 = vmatprep.subr.bf16.mxu0 0
    %389 = vmatpush1.bf16.msra.mxu0 0
    %390 = vmatprep.subr.bf16.mxu0 0
    %391 = vmatpush1.bf16.msra.mxu0 0
    %392 = vmatprep.subr.bf16.mxu0 0
    %393 = vmatpush1.bf16.msra.mxu0 0
    %394 = vmatprep.subr.bf16.mxu0 0
    %395 = vmatpush1.bf16.msra.mxu0 0
    %396 = vmatprep.subr.bf16.mxu0 0
    %397 = vmatpush1.bf16.msra.mxu0 0
    %398 = vmatprep.mubr.bf16.mxu0 0
    %399 = vmatmul.mubr.bf16.gmra.mrb[0].mxu0 %v323
    %v400 = vpop.f32.mrb[0].mxu0
    %v401 = vadd.f32 0.0, %v400
    %v402 = vpop.f32.mrb[0].mxu0
    %v403 = vadd.f32 0.0, %v402
    %v404 = vpop.f32.mrb[0].mxu0
    %v405 = vpop.f32.mrb[0].mxu0
    %406 = vdwg.mxu0
    %407 = vmatprep.subr.bf16.mxu0 0
    %408 = vmatpush1.bf16.msra.mxu0 %v315
    %409 = vmatprep.subr.bf16.mxu0 0
    %410 = vmatpush1.bf16.msra.mxu0 0
    %411 = vmatprep.subr.bf16.mxu0 0
    %412 = vmatpush1.bf16.msra.mxu0 0
    %413 = vmatprep.subr.bf16.mxu0 0
    %414 = vmatpush1.bf16.msra.mxu0 0
    %415 = vmatprep.subr.bf16.mxu0 0
    %416 = vmatpush1.bf16.msra.mxu0 0
    %417 = vmatprep.subr.bf16.mxu0 0
    %418 = vmatpush1.bf16.msra.mxu0 0
    %419 = vmatprep.subr.bf16.mxu0 0
    %420 = vmatpush1.bf16.msra.mxu0 0
    %421 = vmatprep.subr.bf16.mxu0 0
    %422 = vmatpush1.bf16.msra.mxu0 0
    %423 = vmatprep.subr.bf16.mxu0 0
    %424 = vmatpush1.bf16.msra.mxu0 0
    %425 = vmatprep.subr.bf16.mxu0 0
    %426 = vmatpush1.bf16.msra.mxu0 0
    %427 = vmatprep.subr.bf16.mxu0 0
    %428 = vmatpush1.bf16.msra.mxu0 0
    %429 = vmatprep.subr.bf16.mxu0 0
    %430 = vmatpush1.bf16.msra.mxu0 0
    %431 = vmatprep.subr.bf16.mxu0 0
    %432 = vmatpush1.bf16.msra.mxu0 0
    %433 = vmatprep.subr.bf16.mxu0 0
    %434 = vmatpush1.bf16.msra.mxu0 0
    %435 = vmatprep.subr.bf16.mxu0 0
    %436 = vmatpush1.bf16.msra.mxu0 0
    %437 = vmatprep.subr.bf16.mxu0 0
    %438 = vmatpush1.bf16.msra.mxu0 0
    %439 = vmatprep.mubr.bf16.mxu0 0
    %440 = vmatmul.mubr.bf16.gmra.mrb[0].mxu0 %v323
    %v441 = vpop.f32.mrb[0].mxu0
    %v442 = vadd.f32 0.0, %v441
    %v443 = vpop.f32.mrb[0].mxu0
    %v444 = vpop.f32.mrb[0].mxu0
    %v445 = vpop.f32.mrb[0].mxu0
    %446 = vdwg.mxu0
    %vm447 = vcmp.gt.f32.partialorder %v360, 0.0
    %vm448 = vcmp.gt.f32.partialorder %v362, 0.0
    %vm449 = vcmp.gt.f32.partialorder %v401, 0.0
    %vm450 = vcmp.gt.f32.partialorder %v403, 0.0
    %vm451 = vcmp.gt.f32.partialorder %v442, 0.0
    %v452 = vsel %vm447, 1, 0
    %v453 = vsel %vm448, 1, 0
    %v454 = vsel %vm449, 1, 0
    %v455 = vsel %vm450, 1, 0
    %v456 = vsel %vm451, 1, 0
    %v457 = vcvt.s32.f32 %v452
    %v458 = vcvt.s32.f32 %v453
    %v459 = vcvt.s32.f32 %v454
    %v460 = vcvt.s32.f32 %v455
    %v461 = vcvt.s32.f32 %v456
    %v462 = vand.u32 2147483647, %v290
    %v463 = vand.u32 2147483647, %v291
    %v464 = vand.u32 2147483647, %v292
    %v465 = vand.u32 2147483647, %v293
    %v466 = vand.u32 2147483647, %v294
    %v467 = vsub.f32 0.0, %v462
    %v468 = vsub.f32 0.0, %v463
    %v469 = vsub.f32 0.0, %v464
    %v470 = vsub.f32 0.0, %v465
    %v471 = vsub.f32 0.0, %v466
    %v472 = vmul.f32 %v467, 1.442695
    %v473 = vpow.pop %v472
    %v474 = vmul.f32 %v468, 1.442695
    %v475 = vpow.pop %v474
    %v476 = vmul.f32 %v469, 1.442695
    %v477 = vpow.pop %v476
    %v478 = vmul.f32 %v470, 1.442695
    %v479 = vpow.pop %v478
    %v480 = vmul.f32 %v471, 1.442695
    %v481 = vpow.pop %v480
    %v482 = vadd.f32 %v473, 1.0
    %v483 = vlog2.pop %v482
    %v484 = vmul.f32 %v483, 0.6931472
    %v485 = vmul.f32 -0.5, %v473
    %v486 = vadd.f32 %v485, 1.0
    %v487 = vmul.f32 %v486, %v473
    %v488 = vand.u32 2147483647, %v473
    %vm489 = vcmp.lt.f32.partialorder %v488, 0.0004427343
    %v490 = vsel %vm489, %v487, %v484
    %v491 = vadd.f32 %v475, 1.0
    %v492 = vlog2.pop %v491
    %v493 = vmul.f32 %v492, 0.6931472
    %v494 = vmul.f32 -0.5, %v475
    %v495 = vadd.f32 %v494, 1.0
    %v496 = vmul.f32 %v495, %v475
    %v497 = vand.u32 2147483647, %v475
    %vm498 = vcmp.lt.f32.partialorder %v497, 0.0004427343
    %v499 = vsel %vm498, %v496, %v493
    %v500 = vadd.f32 %v477, 1.0
    %v501 = vlog2.pop %v500
    %v502 = vmul.f32 %v501, 0.6931472
    %v503 = vmul.f32 -0.5, %v477
    %v504 = vadd.f32 %v503, 1.0
    %v505 = vmul.f32 %v504, %v477
    %v506 = vand.u32 2147483647, %v477
    %vm507 = vcmp.lt.f32.partialorder %v506, 0.0004427343
    %v508 = vsel %vm507, %v505, %v502
    %v509 = vadd.f32 %v479, 1.0
    %v510 = vlog2.pop %v509
    %v511 = vmul.f32 %v510, 0.6931472
    %v512 = vmul.f32 -0.5, %v479
    %v513 = vadd.f32 %v512, 1.0
    %v514 = vmul.f32 %v513, %v479
    %v515 = vand.u32 2147483647, %v479
    %vm516 = vcmp.lt.f32.partialorder %v515, 0.0004427343
    %v517 = vsel %vm516, %v514, %v511
    %v518 = vadd.f32 %v481, 1.0
    %v519 = vlog2.pop %v518
    %v520 = vmul.f32 %v519, 0.6931472
    %v521 = vmul.f32 -0.5, %v481
    %v522 = vadd.f32 %v521, 1.0
    %v523 = vmul.f32 %v522, %v481
    %v524 = vand.u32 2147483647, %v481
    %vm525 = vcmp.lt.f32.partialorder %v524, 0.0004427343
    %v526 = vsel %vm525, %v523, %v520
    %v527 = vmax.f32 %v290, 0.0
    %v528 = vmax.f32 %v291, 0.0
    %v529 = vmax.f32 %v292, 0.0
    %v530 = vmax.f32 %v293, 0.0
    %v531 = vmax.f32 %v294, 0.0
    %v532 = vadd.f32 %v490, %v527
    %v533 = vadd.f32 %v499, %v528
    %v534 = vadd.f32 %v508, %v529
    %v535 = vadd.f32 %v517, %v530
    %v536 = vadd.f32 %v526, %v531
    %v537 = vmul.f32 %v457, %v290
    %v538 = vmul.f32 %v458, %v291
    %v539 = vmul.f32 %v459, %v292
    %v540 = vmul.f32 %v460, %v293
    %v541 = vmul.f32 %v461, %v294
    %v542 = vsub.f32 %v532, %v537
    %v543 = vsub.f32 %v533, %v538
    %v544 = vsub.f32 %v534, %v539
    %v545 = vsub.f32 %v535, %v540
    %v546 = vsub.f32 %v536, %v541
    %s547 = sadd.s32 0, 0
    %s548 = smul.u32 %s547, 640
    %s549 = sadd.s32 %s548, 640
    %p550 = scmp.gt.s32.totalorder %s549, 600
    %p551 = scmp.le.s32.totalorder %s549, 600
    // Predicated region
    $region38: #{tpu_custom_call.1} parent=1 // pred_check
      %p552 = pneg %p551
    $region39: #{tpu_custom_call.1} parent=1 // pred_check_branch
      %554 = sbr.rel (%p552) target = $region41
    $region40: #{tpu_custom_call.1} parent=1 // pred_region
      %v555 = vld [vmem:[#allocation2] sm:$0xff]
      %v556 = vld [vmem:[#allocation2 + $0x8] sm:$0xff]
      %v557 = vld [vmem:[#allocation2 + $0x10] sm:$0xff]
      %v558 = vld [vmem:[#allocation2 + $0x18] sm:$0xff]
      %v559 = vld [vmem:[#allocation2 + $0x20] sm:$0xff]
      %v560 = vadd.f32 %v555, %v542
      %v561 = vadd.f32 %v556, %v543
      %v562 = vadd.f32 %v557, %v544
      %v563 = vadd.f32 %v558, %v545
      %v564 = vadd.f32 %v559, %v546
      %565 = vst [vmem:[#allocation2] sm:$0xff] %v560
      %566 = vst [vmem:[#allocation2 + $0x8] sm:$0xff] %v561
      %567 = vst [vmem:[#allocation2 + $0x10] sm:$0xff] %v562
      %568 = vst [vmem:[#allocation2 + $0x18] sm:$0xff] %v563
      %569 = vst [vmem:[#allocation2 + $0x20] sm:$0xff] %v564
    $region41: #{tpu_custom_call.1} parent=1 // pred_fallthru
      _
    // Predicated region
    $region42: #{tpu_custom_call.1} parent=1 // pred_check
      %p570 = pneg %p550
    $region43: #{tpu_custom_call.1} parent=1 // pred_check_branch
      %572 = sbr.rel (%p570) target = $region45
    $region44: #{tpu_custom_call.1} parent=1 // pred_region
      %v573 = vlaneseq
      %v574 = vand.u32 %v573, 127
      %v575 = vadd.s32 %v574, 128
      %v576 = vadd.s32 %v574, 256
      %v577 = vadd.s32 %v574, 384
      %v578 = vadd.s32 %v574, 512
      %s579 = ssub.s32 600, %s548
      %v580 = vstv %s579
      %vm581 = vcmp.lt.s32.totalorder %v574, %v580
      %vm582 = vcmp.lt.s32.totalorder %v575, %v580
      %vm583 = vcmp.lt.s32.totalorder %v576, %v580
      %vm584 = vcmp.lt.s32.totalorder %v577, %v580
      %vm585 = vcmp.lt.s32.totalorder %v578, %v580
      %v586 = vld [vmem:[#allocation2] sm:$0xff]
      %v587 = vld [vmem:[#allocation2 + $0x8] sm:$0xff]
      %v588 = vld [vmem:[#allocation2 + $0x10] sm:$0xff]
      %v589 = vld [vmem:[#allocation2 + $0x18] sm:$0xff]
      %v590 = vld [vmem:[#allocation2 + $0x20] sm:$0xff]
      %v591 = vsel %vm581, %v542, 0.0
      %v592 = vsel %vm582, %v543, 0.0
      %v593 = vsel %vm583, %v544, 0.0
      %v594 = vsel %vm584, %v545, 0.0
      %v595 = vsel %vm585, %v546, 0.0
      %v596 = vadd.f32 %v586, %v591
      %v597 = vadd.f32 %v587, %v592
      %v598 = vadd.f32 %v588, %v593
      %v599 = vadd.f32 %v589, %v594
      %v600 = vadd.f32 %v590, %v595
      %601 = vst [vmem:[#allocation2] sm:$0xff] %v596
      %602 = vst [vmem:[#allocation2 + $0x8] sm:$0xff] %v597
      %603 = vst [vmem:[#allocation2 + $0x10] sm:$0xff] %v598
      %604 = vst [vmem:[#allocation2 + $0x18] sm:$0xff] %v599
      %605 = vst [vmem:[#allocation2 + $0x20] sm:$0xff] %v600
    $region45: #{tpu_custom_call.1} parent=1 // pred_fallthru
      _
    // Predicated region
    $region46: #{tpu_custom_call.1} parent=1 // pred_check
      %p606 = pneg %p82
    $region47: #{tpu_custom_call.1} parent=1 // pred_check_branch
      %608 = sbr.rel (%p606) target = $region49
    $region48: #{tpu_custom_call.1} parent=1 // pred_region
      %v609 = vld [vmem:[#allocation2] sm:$0xff]
      %v610 = vld [vmem:[#allocation2 + $0x8] sm:$0xff]
      %v611 = vld [vmem:[#allocation2 + $0x10] sm:$0xff]
      %v612 = vld [vmem:[#allocation2 + $0x18] sm:$0xff]
      %v613 = vld [vmem:[#allocation2 + $0x20] sm:$0xff]
      %v614 = vadd.f32 %v609, %v610
      %v615 = vadd.f32 %v614, %v611
      %v616 = vadd.f32 %v615, %v612
      %v617 = vadd.f32 %v616, %v613
      %618 = vadd.xlane.f32.xlu0 %v617
      %v619 = vpop.xlane.xlu0 %618
      %v620 = vrot.slane %v619, 4
      %v621 = vadd.f32 %v619, %v620
      %v622 = vrot.slane %v621, 2
      %v623 = vadd.f32 %v621, %v622
      %v624 = vrot.slane %v623, 1
      %v625 = vadd.f32 %v623, %v624
      %s626 = vtos %v625
      %v627 = vrcp.pop 4800.0
      %s628 = vtos %v627
      %s629 = smul.f32 %s626, %s628
      %v630 = vand.u32 2147483647, %v91
      %v631 = vsub.f32 %v630, 1.0
      %v632 = vand.u32 2147483647, %v631
      %v633 = vsel %vm164, %v632, 0.0
      %634 = vadd.xlane.f32.xlu0 %v633
      %v635 = vpop.xlane.xlu0 %634
      %v636 = vrot.slane %v635, 4
      %v637 = vadd.f32 %v635, %v636
      %v638 = vrot.slane %v637, 2
      %v639 = vadd.f32 %v637, %v638
      %v640 = vrot.slane %v639, 1
      %v641 = vadd.f32 %v639, %v640
      %s642 = vtos %v641
      %v643 = vrcp.pop 256.0
      %s644 = vtos %v643
      %s645 = smul.f32 %s642, %s644
      %s646 = smul.f32 %s645, 0.1
      %p647 = scmp.eq.s32.totalorder 0, 0
      %s648 = scalar_select %p647, %s646, 0.0
      %s649 = sadd.f32 %s629, %s648
      %v650 = vstv %s649
      %651 = vst [vmem:[#allocation11] sm:$0xff] %v650
    $region49: #{tpu_custom_call.1} parent=1 // pred_fallthru
      _
    // Predicated region
    $region50: #{tpu_custom_call.1} parent=1 // pred_check
      _
    $region51: #{tpu_custom_call.1} parent=1 // pred_check_branch
      %653 = sbr.rel (0) target = $region53
    $region52: #{tpu_custom_call.1} parent=1 // pred_region
      %s655 = ssub.s32 128, 128
      %656 = vsyncadd [#allocation5], %s655
      %s658 = sshll.u32 [#allocation11], 4
      %s659 = int_to_ptr.vmem [resolvable:$true] %s658
      %661 = dma.vmem_to_hbm [thread:$0]  %s659, 128, %s4, [#allocation5]
    $region53: #{tpu_custom_call.1} parent=1 // pred_fallthru
      _
    // Predicated region
    $region54: #{tpu_custom_call.1} parent=1 // pred_check
      _
    $region55: #{tpu_custom_call.1} parent=1 // pred_check_branch
      %663 = sbr.rel (0) target = $region57
    $region56: #{tpu_custom_call.1} parent=1 // pred_region
      %664 = dma.done [#allocation5], 128
    $region57: #{tpu_custom_call.1} parent=1 // pred_fallthru
      _
    %665 = vsyncpa [#allocation4], 1
    %666 = vsyncpa [#allocation7], 1
    %667 = vsyncpa [#allocation10], 1
    %668 = vsyncpa [#allocation5], 1

</llo_original>
